<compile_context>
chip_gen: v6e
topology: v6e:2x2x1
jax: 0.10.0
libtpu: 0.0.40
codegen_flags: <defaults>
</compile_context>

<pallas_src>
import functools
import math

import jax
import jax.numpy as jnp
from jax.experimental import pallas as pl
from jax.experimental.pallas import tpu as pltpu

IN_CHANNELS = 4
NUM_CLASSES = 3
BN_EPS = 1e-5
PREF_LANE_TILE = 256  # lane tile for the M (= N*D*H*W) axis


def _pick_lane_tile(m):
    """Largest clean lane tile that divides m (avoids padding & masked stores)."""
    if m % PREF_LANE_TILE == 0:
        return PREF_LANE_TILE
    if m % 128 == 0:
        return 128
    return m  # tiny levels: single full-width block


# ----------------------------------------------------------------------------
# Pallas kernels
# ----------------------------------------------------------------------------
def _matmul_bias_kernel(w_ref, x_ref, b_ref, o_ref, *, relu):
    # w_ref: (C_out, K) bf16, x_ref: (K, TL) bf16, b_ref: (C_out, 1) f32,
    # o_ref: (C_out, TL).  Lane-dense output (TL >= 128 for all non-trivial levels).
    acc = jnp.dot(w_ref[...], x_ref[...], preferred_element_type=jnp.float32)
    acc = acc + b_ref[...]          # broadcast bias over lanes, f32 epilogue
    if relu:
        acc = jnp.maximum(acc, 0.0)
    o_ref[...] = acc.astype(o_ref.dtype)


def pallas_matmul_bias(w_mat, x_mat, bias_col, *, relu, out_dtype):
    """out = w_mat @ x_mat + bias_col (+ ReLU).  w:(C_out,K) x:(K,M) bias:(C_out,1)."""
    c_out, k = w_mat.shape
    k2, m = x_mat.shape
    assert k == k2
    tl = _pick_lane_tile(m)
    return pl.pallas_call(
        functools.partial(_matmul_bias_kernel, relu=relu),
        out_shape=jax.ShapeDtypeStruct((c_out, m), out_dtype),
        grid=(m // tl,),
        in_specs=[
            pl.BlockSpec((c_out, k), lambda i: (0, 0)),   # weights: constant block
            pl.BlockSpec((k, tl), lambda i: (0, i)),      # activations: lane tiles
            pl.BlockSpec((c_out, 1), lambda i: (0, 0)),   # bias
        ],
        out_specs=pl.BlockSpec((c_out, tl), lambda i: (0, i)),
        compiler_params=pltpu.CompilerParams(dimension_semantics=("parallel",)),
    )(w_mat, x_mat, bias_col)


def _maxpool_kernel(x_ref, o_ref):
    # x_ref: (8, TL) -> o_ref: (1, TL); max over the 2x2x2 window on the sublane axis.
    o_ref[...] = jnp.max(x_ref[...], axis=0, keepdims=True)


def maxpool3d_2(x):
    """MaxPool3d(kernel=2, stride=2) on CNDHW input, lane-tiled Pallas reduction."""
    c, n, d, h, w = x.shape
    d2, h2, w2 = d // 2, h // 2, w // 2
    xw = (
        x.reshape(c, n, d2, 2, h2, 2, w2, 2)
        .transpose(3, 5, 7, 0, 1, 2, 4, 6)
        .reshape(8, c * n * d2 * h2 * w2)
    )
    L = xw.shape[1]
    tl = _pick_lane_tile(L)
    out = pl.pallas_call(
        _maxpool_kernel,
        out_shape=jax.ShapeDtypeStruct((1, L), x.dtype),
        grid=(L // tl,),
        in_specs=[pl.BlockSpec((8, tl), lambda i: (0, i))],
        out_specs=pl.BlockSpec((1, tl), lambda i: (0, i)),
        compiler_params=pltpu.CompilerParams(dimension_semantics=("parallel",)),
    )(xw)
    return out.reshape(c, n, d2, h2, w2)


# ----------------------------------------------------------------------------
# Conv building blocks (XLA glue for patch gather + Pallas matmul hot path)
# ----------------------------------------------------------------------------
def _im2col_T(x):
    """x: (C, N, D, H, W) -> colsT: (C*27, N*D*H*W), row order (c, kd, kh, kw)."""
    c, n, d, h, w = x.shape
    xp = jnp.pad(x, ((0, 0), (0, 0), (1, 1), (1, 1), (1, 1)))
    shifts = [
        xp[:, :, kd:kd + d, kh:kh + h, kw:kw + w]
        for kd in range(3) for kh in range(3) for kw in range(3)
    ]
    cols = jnp.stack(shifts, axis=1)               # (C, 27, N, D, H, W)
    return cols.reshape(c * 27, n * d * h * w)


def conv3x3_bn_relu(x, w_mat, bias_col):
    """Conv3d(k=3, pad=1) with BN folded in, then ReLU.  x: (C, N, D, H, W) bf16."""
    c, n, d, h, w = x.shape
    cols = _im2col_T(x)                                        # (C*27, M) bf16
    out = pallas_matmul_bias(w_mat, cols, bias_col, relu=True,
                             out_dtype=jnp.bfloat16)           # (C_out, M)
    return out.reshape(-1, n, d, h, w)                         # zero-cost reshape


def conv_transpose_2x2x2(x, w_t, bias_col):
    """ConvTranspose3d(k=2, stride=2).  x: (C_in, N, d, h, w); w_t: (C_out*8, C_in)."""
    c_in, n, d, h, w = x.shape
    c_out = w_t.shape[0] // 8
    xm = x.reshape(c_in, n * d * h * w)
    out = pallas_matmul_bias(w_t, xm, bias_col, relu=False,
                             out_dtype=jnp.bfloat16)           # (C_out*8, M)
    out = out.reshape(c_out, 2, 2, 2, n, d, h, w)
    # interleave the 8 sub-positions onto the upsampled grid (XLA glue)
    out = out.transpose(0, 4, 5, 1, 6, 2, 7, 3).reshape(c_out, n, 2 * d, 2 * h, 2 * w)
    return out


def conv1x1x1(x, w_mat, bias_col):
    c, n, d, h, w = x.shape
    xm = x.reshape(c, n * d * h * w)
    out = pallas_matmul_bias(w_mat, xm, bias_col, relu=False,
                             out_dtype=jnp.float32)            # f32 logits
    return out.reshape(-1, n, d, h, w)


# ----------------------------------------------------------------------------
# Deterministic parameter construction (synthetic; BN folded at setup time)
# ----------------------------------------------------------------------------
def _init_conv(key, c_in, c_out, k):
    wk, bk = jax.random.split(key)
    fan_in = c_in * k ** 3
    bound = 1.0 / math.sqrt(fan_in)
    w = jax.random.uniform(wk, (c_out, c_in, k, k, k), jnp.float32, -bound, bound)
    b = jax.random.uniform(bk, (c_out,), jnp.float32, -bound, bound)
    return w, b


def _init_bn(key, c):
    k1, k2, k3 = jax.random.split(key, 3)
    gamma = 1.0 + 0.1 * jax.random.normal(k1, (c,), jnp.float32)
    beta = 0.1 * jax.random.normal(k2, (c,), jnp.float32)
    mean = 0.1 * jax.random.normal(k3, (c,), jnp.float32)
    var = jnp.ones((c,), jnp.float32)
    return gamma, beta, mean, var


def _conv_bn_folded(key, c_in, c_out):
    """Conv3d(3)+BatchNorm3d(eval) folded into a (C_out, C_in*27) bf16 weight + f32 bias."""
    ck, bnk = jax.random.split(key)
    w, b = _init_conv(ck, c_in, c_out, 3)
    gamma, beta, mean, var = _init_bn(bnk, c_out)
    scale = gamma / jnp.sqrt(var + BN_EPS)
    w_f = w * scale[:, None, None, None, None]
    b_f = (b - mean) * scale + beta
    w_mat = w_f.reshape(c_out, c_in * 27).astype(jnp.bfloat16)   # row order (c, kd, kh, kw)
    return w_mat, b_f[:, None]


def _conv_transpose_params(key, c_in, c_out):
    wk, bk = jax.random.split(key)
    bound = 1.0 / math.sqrt(c_in * 8)
    w = jax.random.uniform(wk, (c_in, c_out, 2, 2, 2), jnp.float32, -bound, bound)
    b = jax.random.uniform(bk, (c_out,), jnp.float32, -bound, bound)
    # W_t[(co,pd,ph,pw), ci] = w[ci, co, pd, ph, pw]
    w_t = w.transpose(1, 2, 3, 4, 0).reshape(c_out * 8, c_in).astype(jnp.bfloat16)
    return w_t, jnp.repeat(b, 8)[:, None]


def make_unet3d_params(key, in_channels, num_classes):
    keys = jax.random.split(key, 12)
    p = {}
    p["enc1a"] = _conv_bn_folded(keys[0], in_channels, 8)
    p["enc1b"] = _conv_bn_folded(keys[1], 8, 16)
    p["enc2a"] = _conv_bn_folded(keys[2], 16, 16)
    p["enc2b"] = _conv_bn_folded(keys[3], 16, 32)
    p["bota"] = _conv_bn_folded(keys[4], 32, 32)
    p["botb"] = _conv_bn_folded(keys[5], 32, 64)
    p["up2"] = _conv_transpose_params(keys[6], 64, 32)
    p["dec2a"] = _conv_bn_folded(keys[7], 64, 32)
    p["dec2b"] = _conv_bn_folded(keys[8], 32, 32)
    p["up1"] = _conv_transpose_params(keys[9], 32, 16)
    p["dec1a"] = _conv_bn_folded(keys[10], 32, 16)
    p["dec1b"] = _conv_bn_folded(keys[11], 16, 16)
    wk, bk = jax.random.split(jax.random.fold_in(key, 99))
    bound = 1.0 / math.sqrt(16)
    w_head = jax.random.uniform(wk, (num_classes, 16), jnp.float32, -bound, bound)
    b_head = jax.random.uniform(bk, (num_classes,), jnp.float32, -bound, bound)
    p["head"] = (w_head.astype(jnp.bfloat16), b_head[:, None])
    return p


# ----------------------------------------------------------------------------
# GlobalModel.forward == UNet3D.forward
# ----------------------------------------------------------------------------
def global_model_forward(x, params):
    # single layout conversion: NCDHW -> channel-major CNDHW, bf16
    xc = jnp.transpose(x, (1, 0, 2, 3, 4)).astype(jnp.bfloat16)
    # encoder
    e1 = conv3x3_bn_relu(xc, *params["enc1a"])
    e1 = conv3x3_bn_relu(e1, *params["enc1b"])
    p1 = maxpool3d_2(e1)
    e2 = conv3x3_bn_relu(p1, *params["enc2a"])
    e2 = conv3x3_bn_relu(e2, *params["enc2b"])
    p2 = maxpool3d_2(e2)
    # bottleneck
    b = conv3x3_bn_relu(p2, *params["bota"])
    b = conv3x3_bn_relu(b, *params["botb"])
    # decoder level 2
    u2 = conv_transpose_2x2x2(b, *params["up2"])
    d2 = jnp.concatenate([u2, e2], axis=0)          # channel concat = axis 0
    d2 = conv3x3_bn_relu(d2, *params["dec2a"])
    d2 = conv3x3_bn_relu(d2, *params["dec2b"])
    # decoder level 1
    u1 = conv_transpose_2x2x2(d2, *params["up1"])
    d1 = jnp.concatenate([u1, e1], axis=0)
    d1 = conv3x3_bn_relu(d1, *params["dec1a"])
    d1 = conv3x3_bn_relu(d1, *params["dec1b"])
    # segmentation head (raw logits, f32) -> back to NCDHW once
    logits = conv1x1x1(d1, *params["head"])
    return jnp.transpose(logits, (1, 0, 2, 3, 4))


if __name__ == "__main__":
    key = jax.random.PRNGKey(0)
    pkey, xkey, tkey = jax.random.split(key, 3)

    # quick numerical sanity check of the fused matmul kernel vs an XLA reference
    k1, k2, k3 = jax.random.split(tkey, 3)
    wt = jax.random.normal(k1, (8, 108), jnp.float32).astype(jnp.bfloat16)
    xt = jax.random.normal(k2, (108, 256), jnp.float32).astype(jnp.bfloat16)
    bt = jax.random.normal(k3, (8, 1), jnp.float32)
    got = pallas_matmul_bias(wt, xt, bt, relu=True, out_dtype=jnp.float32)
    ref = jnp.maximum(wt.astype(jnp.float32) @ xt.astype(jnp.float32) + bt, 0.0)
    assert jnp.allclose(got, ref, rtol=1e-2, atol=1e-2)

    params = make_unet3d_params(pkey, IN_CHANNELS, NUM_CLASSES)

    # Small NCDHW volume: batch=2, channels=4, depth=height=width=8
    x = jax.random.normal(xkey, (2, IN_CHANNELS, 8, 8, 8), jnp.float32)

    fwd = jax.jit(functools.partial(global_model_forward, params=params))
    out = fwd(x)
    jax.block_until_ready(out)

    assert out.shape == (2, NUM_CLASSES, 8, 8, 8), out.shape
    assert out.dtype == jnp.float32
    assert bool(jnp.all(jnp.isfinite(out)))
    print("KERNEL_OK")
</pallas_src>

<mosaic_0001>
module attributes {stable_mosaic.version = 11 : i64} {
  func.func @_matmul_bias_kernel(%arg0: i32, %arg1: memref<8x108xbf16, #tpu.memory_space<vmem>>, %arg2: memref<108x256xbf16, #tpu.memory_space<vmem>>, %arg3: memref<8x1xf32, #tpu.memory_space<vmem>>, %arg4: memref<8x256xf32, #tpu.memory_space<vmem>>) attributes {dimension_semantics = [#tpu.dimension_semantics<parallel>], iteration_bounds = array<i64: 1>, scalar_prefetch = 0 : i64, scratch_operands = 0 : i64, tpu.core_type = #tpu.core_type<tc>, window_params = [{pipeline_mode = #tpu.pipeline_mode<synchronous>, transform_indices = @transform_0, window_bounds = array<i64: 8, 108>}, {transform_indices = @transform_1, window_bounds = array<i64: 108, 256>}, {pipeline_mode = #tpu.pipeline_mode<synchronous>, transform_indices = @transform_2, window_bounds = array<i64: 8, 1>}, {transform_indices = @transform_3, window_bounds = array<i64: 8, 256>}]} {
    %c0 = arith.constant 0 : index
    %c0_0 = arith.constant 0 : index
    %0 = vector.load %arg1[%c0, %c0_0] : memref<8x108xbf16, #tpu.memory_space<vmem>>, vector<8x108xbf16>
    %c0_1 = arith.constant 0 : index
    %c0_2 = arith.constant 0 : index
    %1 = vector.load %arg2[%c0_1, %c0_2] : memref<108x256xbf16, #tpu.memory_space<vmem>>, vector<108x256xbf16>
    %cst = arith.constant dense<0.000000e+00> : vector<8x256xf32>
    %2 = tpu.matmul %0, %1, %cst {dimension_numbers = #tpu.dot_dimension_numbers<[1], [0], [0], [1], [0, 0, 1, 1], [], []>} : vector<8x108xbf16>, vector<108x256xbf16>, vector<8x256xf32> -> vector<8x256xf32>
    %c0_3 = arith.constant 0 : index
    %c0_4 = arith.constant 0 : index
    %3 = vector.load %arg3[%c0_3, %c0_4] : memref<8x1xf32, #tpu.memory_space<vmem>>, vector<8x1xf32>
    %4 = vector.broadcast %3 : vector<8x1xf32> to vector<8x256xf32>
    %5 = arith.addf %2, %4 : vector<8x256xf32>
    %cst_5 = arith.constant 0.000000e+00 : f32
    %6 = vector.broadcast %cst_5 : f32 to vector<8x256xf32>
    %7 = arith.maximumf %5, %6 : vector<8x256xf32>
    %c0_6 = arith.constant 0 : index
    %c0_7 = arith.constant 0 : index
    %8 = vector.load %arg4[%c0_6, %c0_7] : memref<8x256xf32, #tpu.memory_space<vmem>>, vector<8x256xf32>
    tpu.vector_store %arg4[%c0_6, %c0_7], %7 {strides = array<i32>} : memref<8x256xf32, #tpu.memory_space<vmem>>, vector<8x256xf32>,
    return
  }
  func.func @transform_0(%arg0: i32) -> (i32, i32) {
    %c0_i32 = arith.constant 0 : i32
    %c0_i32_0 = arith.constant 0 : i32
    %c0_i32_1 = arith.constant 0 : i32
    return %c0_i32, %c0_i32_0 : i32, i32
  }
  func.func @transform_1(%arg0: i32) -> (i32, i32) {
    %c0_i32 = arith.constant 0 : i32
    %c0_i32_0 = arith.constant 0 : i32
    return %c0_i32, %arg0 : i32, i32
  }
  func.func @transform_2(%arg0: i32) -> (i32, i32) {
    %c0_i32 = arith.constant 0 : i32
    %c0_i32_0 = arith.constant 0 : i32
    %c0_i32_1 = arith.constant 0 : i32
    return %c0_i32, %c0_i32_0 : i32, i32
  }
  func.func @transform_3(%arg0: i32) -> (i32, i32) {
    %c0_i32 = arith.constant 0 : i32
    %c0_i32_0 = arith.constant 0 : i32
    return %c0_i32, %arg0 : i32, i32
  }
}

</mosaic_0001>

<llo_original>
// kernel: tpu_custom_call.1
$region0: #{tpu_custom_call.1}
  #allocation0 [shape = 'u32[]', space=smem, size = 0x4, offset = 0x4, fixed_abs, tag = 'smem constant byte address 0x4 - core index']
  #allocation1 [shape = 'u32[144,128]{1,0:T(1,128)}', space=vmem, size = 0x12000, scoped, tag = 'internal scratch']
  %s0 = inlined_call_operand.vmem [shape: bf16[8,108], index: 0, kind: input, shape index: {}]
  %s1 = inlined_call_operand.hbm [shape: bf16[108,256], index: 1, kind: input, shape index: {}]
  %s2 = inlined_call_operand.vmem [shape: f32[8,1], index: 2, kind: input, shape index: {}]
  %s3 = inlined_call_operand.hbm [shape: f32[8,256], index: 3, kind: output, shape index: {}]
  %s4 = sld [smem:[#allocation0]]
  $region26: #{tpu_custom_call.1} parent=0
    _
  %s6 = ssub.s32 1, %s4
  %s7 = scalar_select 0, %s6, %s4
  $region1: #{tpu_custom_call.1} parent=0
    #allocation2 [shape = 'u8[57344]{0}', space=vmem, size = 0xe000, scoped, tag = 'input window, operand 1, single buffered']
    #allocation3 [shape = 's32[1]{0}', space=sflag, size = 0x4, scoped, tag = 'scoped memory for tpu_custom_call.1']
    #allocation4 [shape = 's32[1]{0}', space=sflag, size = 0x4, scoped, tag = 'scoped memory for tpu_custom_call.1']
    #allocation5 [shape = 'u8[8192]{0}', space=vmem, size = 0x2000, scoped, tag = 'output window, operand 0, single buffered']
    %8 = vsyncpa [#allocation3], 0
    %9 = vsyncpa [#allocation4], 0
    // Predicated region
    $region2: #{tpu_custom_call.1} parent=1 // pred_check
      _
    $region3: #{tpu_custom_call.1} parent=1 // pred_check_branch
      %11 = sbr.rel (0) target = $region5
    $region4: #{tpu_custom_call.1} parent=1 // pred_region
      _
    $region5: #{tpu_custom_call.1} parent=1 // pred_fallthru
      _
    // Predicated region
    $region6: #{tpu_custom_call.1} parent=1 // pred_check
      _
    $region7: #{tpu_custom_call.1} parent=1 // pred_check_branch
      %13 = sbr.rel (0) target = $region9
    $region8: #{tpu_custom_call.1} parent=1 // pred_region
      %s15 = ssub.s32 1792, 1792
      %16 = vsyncadd [#allocation3], %s15
      %s17 = sshll.u32 [#allocation2], 4
      %s18 = int_to_ptr.vmem [resolvable:$true] %s17
      %23 = dma.hbm_to_vmem [thread:$0]  %s1, 1792, %s18, [#allocation3], 128, 128, 8
    $region9: #{tpu_custom_call.1} parent=1 // pred_fallthru
      _
    // Predicated region
    $region10: #{tpu_custom_call.1} parent=1 // pred_check
      _
    $region11: #{tpu_custom_call.1} parent=1 // pred_check_branch
      %25 = sbr.rel (0) target = $region13
    $region12: #{tpu_custom_call.1} parent=1 // pred_region
      _
    $region13: #{tpu_custom_call.1} parent=1 // pred_fallthru
      _
    // Predicated region
    $region14: #{tpu_custom_call.1} parent=1 // pred_check
      _
    $region15: #{tpu_custom_call.1} parent=1 // pred_check_branch
      %27 = sbr.rel (0) target = $region17
    $region16: #{tpu_custom_call.1} parent=1 // pred_region
      %28 = dma.done [#allocation3], 1792
    $region17: #{tpu_custom_call.1} parent=1 // pred_fallthru
      _
    %v30 = vld [vmem:[%s0] sm:$0xf]
    %v31 = vld [vmem:[#allocation2] sm:$0xff]
    %v32 = vld [vmem:[#allocation2 + $0x8] sm:$0xff]
    %v33 = vld [vmem:[#allocation2 + $0x10] sm:$0xff]
    %v34 = vld [vmem:[#allocation2 + $0x18] sm:$0xff]
    %v35 = vld [vmem:[#allocation2 + $0x20] sm:$0xff]
    %v36 = vld [vmem:[#allocation2 + $0x28] sm:$0xff]
    %v37 = vld [vmem:[#allocation2 + $0x30] sm:$0xff]
    %v38 = vld [vmem:[#allocation2 + $0x38] sm:$0xff]
    %v39 = vld [vmem:[#allocation2 + $0x40] sm:$0xff]
    %v40 = vld [vmem:[#allocation2 + $0x48] sm:$0xff]
    %v41 = vld [vmem:[#allocation2 + $0x50] sm:$0xff]
    %v42 = vld [vmem:[#allocation2 + $0x58] sm:$0xff]
    %v43 = vld [vmem:[#allocation2 + $0x60] sm:$0xff]
    %v44 = vld [vmem:[#allocation2 + $0x68] sm:$0x33]
    %v45 = vld [vmem:[%s2] sm:$0xff]
    %47 = vset.pattern.permute.xlu0 0
    %48 = vperm.xlu0 %47, %v45
    %v49 = vpop.permute.xlu0 %48
    %v65 = vunpack.c.l.b16 %v31
    %v66 = vunpack.c.h.b16 %v31
    %v67 = vunpack.c.l.b16 %v32
    %v68 = vunpack.c.h.b16 %v32
    %v69 = vunpack.c.l.b16 %v33
    %v70 = vunpack.c.h.b16 %v33
    %v71 = vunpack.c.l.b16 %v34
    %v72 = vunpack.c.h.b16 %v34
    %v73 = vunpack.c.l.b16 %v35
    %v74 = vunpack.c.h.b16 %v35
    %v75 = vunpack.c.l.b16 %v36
    %v76 = vunpack.c.h.b16 %v36
    %v77 = vunpack.c.l.b16 %v37
    %v78 = vunpack.c.h.b16 %v37
    %v79 = vunpack.c.l.b16 %v38
    %v80 = vunpack.c.h.b16 %v38
    %v81 = vunpack.c.l.b16 %v39
    %v82 = vunpack.c.h.b16 %v39
    %v83 = vunpack.c.l.b16 %v40
    %v84 = vunpack.c.h.b16 %v40
    %v85 = vunpack.c.l.b16 %v41
    %v86 = vunpack.c.h.b16 %v41
    %v87 = vunpack.c.l.b16 %v42
    %v88 = vunpack.c.h.b16 %v42
    %v89 = vunpack.c.l.b16 %v43
    %v90 = vunpack.c.h.b16 %v43
    %v91 = vunpack.c.l.b16 %v44
    %v92 = vunpack.c.h.b16 %v44
    %v93 = vpack.c.b16 %v67, %v65
    %v94 = vpack.c.b16 %v68, %v66
    %v95 = vpack.c.b16 %v71, %v69
    %v96 = vpack.c.b16 %v72, %v70
    %v97 = vpack.c.b16 %v75, %v73
    %v98 = vpack.c.b16 %v76, %v74
    %v99 = vpack.c.b16 %v79, %v77
    %v100 = vpack.c.b16 %v80, %v78
    %v101 = vpack.c.b16 %v83, %v81
    %v102 = vpack.c.b16 %v84, %v82
    %v103 = vpack.c.b16 %v87, %v85
    %v104 = vpack.c.b16 %v88, %v86
    %v105 = vpack.c.b16 %v91, %v89
    %v106 = vpack.c.b16 %v92, %v90
    %vm119 = vcmask 883712
    %v121 = vsel %vm119, %v30, 0
    %vm123 = vcmask 1045504
    %v125 = vsel %vm123, %v105, 0
    %v128 = vsel %vm123, %v106, 0
    %130 = vmatprep.subr.bf16.mxu0 0
    %131 = vmatpush1.bf16.msra.mxu0 0
    %132 = vmatprep.subr.bf16.mxu0 %v128
    %133 = vmatpush1.bf16.msra.mxu0 %v125
    %134 = vmatprep.subr.bf16.mxu0 %v104
    %135 = vmatpush1.bf16.msra.mxu0 %v103
    %136 = vmatprep.subr.bf16.mxu0 %v102
    %137 = vmatpush1.bf16.msra.mxu0 %v101
    %138 = vmatprep.subr.bf16.mxu0 %v100
    %139 = vmatpush1.bf16.msra.mxu0 %v99
    %140 = vmatprep.subr.bf16.mxu0 %v98
    %141 = vmatpush1.bf16.msra.mxu0 %v97
    %142 = vmatprep.subr.bf16.mxu0 %v96
    %143 = vmatpush1.bf16.msra.mxu0 %v95
    %144 = vmatprep.subr.bf16.mxu0 %v94
    %145 = vmatpush1.bf16.msra.mxu0 %v93
    %146 = vmatprep.subr.bf16.mxu0 0
    %147 = vmatpush2.bf16.msra.mxu0 0
    %148 = vmatprep.subr.bf16.mxu0 0
    %149 = vmatpush2.bf16.msra.mxu0 0
    %150 = vmatprep.subr.bf16.mxu0 0
    %151 = vmatpush2.bf16.msra.mxu0 0
    %152 = vmatprep.subr.bf16.mxu0 0
    %153 = vmatpush2.bf16.msra.mxu0 0
    %154 = vmatprep.subr.bf16.mxu0 0
    %155 = vmatpush2.bf16.msra.mxu0 0
    %156 = vmatprep.subr.bf16.mxu0 0
    %157 = vmatpush2.bf16.msra.mxu0 0
    %158 = vmatprep.subr.bf16.mxu0 0
    %159 = vmatpush2.bf16.msra.mxu0 0
    %160 = vmatprep.subr.bf16.mxu0 0
    %161 = vmatpush2.bf16.msra.mxu0 0
    %162 = vmatprep.mubr.bf16.mxu0 0
    %163 = vmatmul.mubr.bf16.gmra.mxu0 %v121
    %v164 = vpop.f32.mrf.mxu0
    %v165 = vadd.f32 %v49, %v164
    %v166 = vpop.f32.mrf.mxu0
    %v167 = vadd.f32 %v49, %v166
    %v168 = vpop.f32.mrf.mxu0
    %v169 = vpop.f32.mrf.mxu0
    %170 = vdwg.mxu0
    %v171 = vmax.f32 %v165, 0.0
    %v172 = vmax.f32 %v167, 0.0
    %173 = vst [vmem:[#allocation5] sm:$0xff] %v171
    %174 = vst [vmem:[#allocation5 + $0x8] sm:$0xff] %v172
    // Predicated region
    $region18: #{tpu_custom_call.1} parent=1 // pred_check
      _
    $region19: #{tpu_custom_call.1} parent=1 // pred_check_branch
      %176 = sbr.rel (0) target = $region21
    $region20: #{tpu_custom_call.1} parent=1 // pred_region
      %s178 = ssub.s32 256, 256
      %179 = vsyncadd [#allocation4], %s178
      %s181 = sshll.u32 [#allocation5], 4
      %s182 = int_to_ptr.vmem [resolvable:$true] %s181
      %184 = dma.vmem_to_hbm [thread:$0]  %s182, 256, %s3, [#allocation4]
    $region21: #{tpu_custom_call.1} parent=1 // pred_fallthru
      _
    // Predicated region
    $region22: #{tpu_custom_call.1} parent=1 // pred_check
      _
    $region23: #{tpu_custom_call.1} parent=1 // pred_check_branch
      %186 = sbr.rel (0) target = $region25
    $region24: #{tpu_custom_call.1} parent=1 // pred_region
      %187 = dma.done [#allocation4], 256
    $region25: #{tpu_custom_call.1} parent=1 // pred_fallthru
      _
    %188 = vsyncpa [#allocation3], 1
    %189 = vsyncpa [#allocation4], 1

</llo_original>
